<compile_context>
chip_gen: v5e
topology: v5e:2x2
jax: 0.10.0
libtpu: 0.0.40
codegen_flags: <defaults>
</compile_context>

<pallas_src>
import jax
import jax.numpy as jnp
from jax.experimental import pallas as pl
from jax.experimental.pallas import tpu as pltpu


def _round_up(v, m):
    return ((v + m - 1) // m) * m


def _pick_row_tile(n):
    # Full graph if small; otherwise the largest MXU-friendly tile dividing N.
    if n <= 512:
        return n
    for t in (512, 256, 128):
        if n % t == 0:
            return t
    return n


def _gcn_kernel(a_ref, x_ref, w_ref, tb_ref, o_ref):
    """One grid step = one tile of node rows, ALL graphs in the batch.

    a_ref : [TN, N]       bf16  row-panel of normalized adjacency A_hat
    x_ref : [B, N, Cin]   bf16  node features, whole batch (grid-invariant)
    w_ref : [Cin, Cp]     bf16  GCN weight, out-channels padded to 128-multiple
    tb_ref: [B, Cp]       f32   hoisted epilogue: t_emb @ Wt + b_t + b_conv
    o_ref : [B, TN, Cp]   f32   output row-panel (lane-dense: Cp % 128 == 0)
    """
    a = a_ref[...]        # [TN, N]   bf16
    w = w_ref[...]        # [Cin, Cp] bf16
    tb = tb_ref[...]      # [B, Cp]   f32
    B = x_ref.shape[0]
    # Batch fused into this single grid step (static unroll; B is small).
    # For large B, add a "parallel" batch-tile grid axis instead.
    for b in range(B):
        # Aggregate first: [TN, N] @ [N, Cin] -> [TN, Cin], f32 MXU accumulation.
        ax = jnp.dot(a, x_ref[b], preferred_element_type=jnp.float32)
        # Project: [TN, Cin] @ [Cin, Cp] -> [TN, Cp], f32 MXU accumulation.
        h = jnp.dot(ax.astype(w.dtype), w, preferred_element_type=jnp.float32)
        # Epilogue in f32 (conv bias + time conditioning already folded into tb).
        o_ref[b] = (h + tb[b:b + 1, :]).astype(o_ref.dtype)


def gcn_conv_with_time(x, t_emb, edge_index, params):
    """x: [B, N, Cin] f32, t_emb: [B, T] f32, edge_index: [2, E] int32."""
    B, N, Cin = x.shape
    W, b_conv, Wt, b_t = (params["W"], params["b_conv"], params["Wt"], params["b_t"])
    Cout = W.shape[1]
    Cp = _round_up(Cout, 128)  # lane-dense output width -> unmasked full-width stores

    # ---- glue (plain JAX): normalized dense adjacency with self-loops -------
    src, dst = edge_index[0], edge_index[1]
    loop = jnp.arange(N, dtype=edge_index.dtype)
    src = jnp.concatenate([src, loop])
    dst = jnp.concatenate([dst, loop])
    A = jnp.zeros((N, N), jnp.float32).at[dst, src].add(1.0)
    deg = A.sum(axis=1)
    dinv = jnp.where(deg > 0, 1.0 / jnp.sqrt(deg), 0.0)
    A_hat = dinv[:, None] * A * dinv[None, :]                        # [N, N] f32

    # ---- hoisted epilogue: time projection + both biases (one tiny XLA matmul)
    tb = t_emb @ Wt + b_t + b_conv                                   # [B, Cout] f32
    tb = jnp.pad(tb, ((0, 0), (0, Cp - Cout)))                       # [B, Cp]   f32

    # ---- MXU inputs in bf16 (f32 accumulation inside the kernel) ------------
    a_bf = A_hat.astype(jnp.bfloat16)                                # [N, N]
    x_bf = x.astype(jnp.bfloat16)                                    # [B, N, Cin]
    w_bf = jnp.pad(W, ((0, 0), (0, Cp - Cout))).astype(jnp.bfloat16) # [Cin, Cp]

    tn = _pick_row_tile(N)        # node-row tile = the only grid axis
    grid = (N // tn,)

    grid_spec = pltpu.PrefetchScalarGridSpec(
        num_scalar_prefetch=0,
        grid=grid,
        in_specs=[
            # A_hat row-panel changes per step -> double-buffered by Pallas.
            pl.BlockSpec((tn, N), lambda r: (r, 0)),
            # x / W / tb have constant block indices -> fetched once, kept
            # resident across row tiles (no re-DMA).
            pl.BlockSpec((B, N, Cin), lambda r: (0, 0, 0)),
            pl.BlockSpec((Cin, Cp), lambda r: (0, 0)),
            pl.BlockSpec((B, Cp), lambda r: (0, 0)),
        ],
        out_specs=pl.BlockSpec((B, tn, Cp), lambda r: (0, r, 0)),
    )

    out_padded = pl.pallas_call(
        _gcn_kernel,
        out_shape=jax.ShapeDtypeStruct((B, N, Cp), jnp.float32),
        grid_spec=grid_spec,
        compiler_params=pltpu.CompilerParams(
            # Independent row tiles -> megacore-shardable (v7x has 2 TCs).
            dimension_semantics=("parallel",),
            # Explicit VMEM budget, safe on v7x's 64 MiB physical VMEM; the
            # blocks here are far below this.
            vmem_limit_bytes=32 * 1024 * 1024,
        ),
    )(a_bf, x_bf, w_bf, tb)

    return out_padded[..., :Cout]    # drop lane padding -> [B, N, Cout]


def _reference(x, t_emb, edge_index, params):
    """Plain-JAX f32 reference of the same forward, for a sanity check."""
    B, N, Cin = x.shape
    src, dst = edge_index[0], edge_index[1]
    loop = jnp.arange(N, dtype=edge_index.dtype)
    src = jnp.concatenate([src, loop])
    dst = jnp.concatenate([dst, loop])
    A = jnp.zeros((N, N), jnp.float32).at[dst, src].add(1.0)
    deg = A.sum(axis=1)
    dinv = jnp.where(deg > 0, 1.0 / jnp.sqrt(deg), 0.0)
    A_hat = dinv[:, None] * A * dinv[None, :]
    h = jnp.einsum("ij,bjc->bic", A_hat, x @ params["W"]) + params["b_conv"]
    t = t_emb @ params["Wt"] + params["b_t"]
    return h + t[:, None, :]


if __name__ == "__main__":
    # small shapes: batch=2, nodes=16, in_channels=4, out_channels=32, time_channels=8
    B, N, Cin, Cout, T = 2, 16, 4, 32, 8

    key = jax.random.PRNGKey(0)
    k_x, k_t, k_w, k_bc, k_wt, k_bt = jax.random.split(key, 6)

    x = jax.random.normal(k_x, (B, N, Cin), jnp.float32)
    t_emb = jax.random.normal(k_t, (B, T), jnp.float32)

    # ring graph edges (both directions), deterministic
    idx = jnp.arange(N, dtype=jnp.int32)
    src = jnp.concatenate([idx, (idx + 1) % N])
    dst = jnp.concatenate([(idx + 1) % N, idx])
    edge_index = jnp.stack([src, dst], axis=0)                       # [2, 2N]

    params = {
        "W": jax.random.normal(k_w, (Cin, Cout), jnp.float32) * 0.1,
        "b_conv": jax.random.normal(k_bc, (Cout,), jnp.float32) * 0.01,
        "Wt": jax.random.normal(k_wt, (T, Cout), jnp.float32) * 0.1,
        "b_t": jax.random.normal(k_bt, (Cout,), jnp.float32) * 0.01,
    }

    out = gcn_conv_with_time(x, t_emb, edge_index, params)
    out = jax.block_until_ready(out)

    ref = _reference(x, t_emb, edge_index, params)
    assert out.shape == (B, N, Cout)
    # bf16 MXU inputs -> compare against the f32 reference at bf16-level tolerance.
    max_err = float(jnp.max(jnp.abs(out - ref)))
    assert jnp.allclose(out, ref, atol=2e-2, rtol=2e-2), max_err

    print("KERNEL_OK")
</pallas_src>

<mosaic_0001>
module attributes {stable_mosaic.version = 11 : i64} {
  func.func @_gcn_kernel(%arg0: i32, %arg1: memref<16x16xbf16, #tpu.memory_space<vmem>>, %arg2: memref<2x16x4xbf16, #tpu.memory_space<vmem>>, %arg3: memref<4x128xbf16, #tpu.memory_space<vmem>>, %arg4: memref<2x128xf32, #tpu.memory_space<vmem>>, %arg5: memref<2x16x128xf32, #tpu.memory_space<vmem>>) attributes {dimension_semantics = [#tpu.dimension_semantics<parallel>], iteration_bounds = array<i64: 1>, scalar_prefetch = 0 : i64, scratch_operands = 0 : i64, tpu.core_type = #tpu.core_type<tc>, window_params = [{transform_indices = @transform_0, window_bounds = array<i64: 16, 16>}, {pipeline_mode = #tpu.pipeline_mode<synchronous>, transform_indices = @transform_1, window_bounds = array<i64: 2, 16, 4>}, {pipeline_mode = #tpu.pipeline_mode<synchronous>, transform_indices = @transform_2, window_bounds = array<i64: 4, 128>}, {pipeline_mode = #tpu.pipeline_mode<synchronous>, transform_indices = @transform_3, window_bounds = array<i64: 2, 128>}, {transform_indices = @transform_4, window_bounds = array<i64: 2, 16, 128>}]} {
    %c0 = arith.constant 0 : index
    %c0_0 = arith.constant 0 : index
    %0 = vector.load %arg1[%c0, %c0_0] : memref<16x16xbf16, #tpu.memory_space<vmem>>, vector<16x16xbf16>
    %c0_1 = arith.constant 0 : index
    %c0_2 = arith.constant 0 : index
    %1 = vector.load %arg3[%c0_1, %c0_2] : memref<4x128xbf16, #tpu.memory_space<vmem>>, vector<4x128xbf16>
    %c0_3 = arith.constant 0 : index
    %c0_4 = arith.constant 0 : index
    %2 = vector.load %arg4[%c0_3, %c0_4] : memref<2x128xf32, #tpu.memory_space<vmem>>, vector<2x128xf32>
    %c0_5 = arith.constant 0 : index
    %c0_6 = arith.constant 0 : index
    %c0_7 = arith.constant 0 : index
    %3 = vector.load %arg2[%c0_5, %c0_6, %c0_7] : memref<2x16x4xbf16, #tpu.memory_space<vmem>>, vector<1x16x4xbf16>
    %4 = vector.shape_cast %3 : vector<1x16x4xbf16> to vector<16x4xbf16>
    %cst = arith.constant dense<0.000000e+00> : vector<16x4xf32>
    %5 = tpu.matmul %0, %4, %cst {dimension_numbers = #tpu.dot_dimension_numbers<[1], [0], [0], [1], [0, 0, 1, 1], [], []>} : vector<16x16xbf16>, vector<16x4xbf16>, vector<16x4xf32> -> vector<16x4xf32>
    %6 = arith.truncf %5 : vector<16x4xf32> to vector<16x4xbf16>
    %cst_8 = arith.constant dense<0.000000e+00> : vector<16x128xf32>
    %7 = tpu.matmul %6, %1, %cst_8 {dimension_numbers = #tpu.dot_dimension_numbers<[1], [0], [0], [1], [0, 0, 1, 1], [], []>} : vector<16x4xbf16>, vector<4x128xbf16>, vector<16x128xf32> -> vector<16x128xf32>
    %8 = vector.extract_strided_slice %2 {offsets = [0, 0], sizes = [1, 128], strides = [1, 1]} : vector<2x128xf32> to vector<1x128xf32>
    %9 = vector.broadcast %8 : vector<1x128xf32> to vector<16x128xf32>
    %10 = arith.addf %7, %9 : vector<16x128xf32>
    %c0_9 = arith.constant 0 : index
    %c0_10 = arith.constant 0 : index
    %c0_11 = arith.constant 0 : index
    %11 = vector.load %arg5[%c0_9, %c0_10, %c0_11] : memref<2x16x128xf32, #tpu.memory_space<vmem>>, vector<1x16x128xf32>
    %12 = vector.shape_cast %11 : vector<1x16x128xf32> to vector<16x128xf32>
    %13 = vector.shape_cast %10 : vector<16x128xf32> to vector<1x16x128xf32>
    tpu.vector_store %arg5[%c0_9, %c0_10, %c0_11], %13 {strides = array<i32>} : memref<2x16x128xf32, #tpu.memory_space<vmem>>, vector<1x16x128xf32>,
    %c1 = arith.constant 1 : index
    %c0_12 = arith.constant 0 : index
    %c0_13 = arith.constant 0 : index
    %14 = vector.load %arg2[%c1, %c0_12, %c0_13] : memref<2x16x4xbf16, #tpu.memory_space<vmem>>, vector<1x16x4xbf16>
    %15 = vector.shape_cast %14 : vector<1x16x4xbf16> to vector<16x4xbf16>
    %cst_14 = arith.constant dense<0.000000e+00> : vector<16x4xf32>
    %16 = tpu.matmul %0, %15, %cst_14 {dimension_numbers = #tpu.dot_dimension_numbers<[1], [0], [0], [1], [0, 0, 1, 1], [], []>} : vector<16x16xbf16>, vector<16x4xbf16>, vector<16x4xf32> -> vector<16x4xf32>
    %17 = arith.truncf %16 : vector<16x4xf32> to vector<16x4xbf16>
    %cst_15 = arith.constant dense<0.000000e+00> : vector<16x128xf32>
    %18 = tpu.matmul %17, %1, %cst_15 {dimension_numbers = #tpu.dot_dimension_numbers<[1], [0], [0], [1], [0, 0, 1, 1], [], []>} : vector<16x4xbf16>, vector<4x128xbf16>, vector<16x128xf32> -> vector<16x128xf32>
    %19 = vector.extract_strided_slice %2 {offsets = [1, 0], sizes = [1, 128], strides = [1, 1]} : vector<2x128xf32> to vector<1x128xf32>
    %20 = vector.broadcast %19 : vector<1x128xf32> to vector<16x128xf32>
    %21 = arith.addf %18, %20 : vector<16x128xf32>
    %c1_16 = arith.constant 1 : index
    %c0_17 = arith.constant 0 : index
    %c0_18 = arith.constant 0 : index
    %22 = vector.load %arg5[%c1_16, %c0_17, %c0_18] : memref<2x16x128xf32, #tpu.memory_space<vmem>>, vector<1x16x128xf32>
    %23 = vector.shape_cast %22 : vector<1x16x128xf32> to vector<16x128xf32>
    %24 = vector.shape_cast %21 : vector<16x128xf32> to vector<1x16x128xf32>
    tpu.vector_store %arg5[%c1_16, %c0_17, %c0_18], %24 {strides = array<i32>} : memref<2x16x128xf32, #tpu.memory_space<vmem>>, vector<1x16x128xf32>,
    return
  }
  func.func @transform_0(%arg0: i32) -> (i32, i32) {
    %c0_i32 = arith.constant 0 : i32
    %c0_i32_0 = arith.constant 0 : i32
    return %arg0, %c0_i32 : i32, i32
  }
  func.func @transform_1(%arg0: i32) -> (i32, i32, i32) {
    %c0_i32 = arith.constant 0 : i32
    %c0_i32_0 = arith.constant 0 : i32
    %c0_i32_1 = arith.constant 0 : i32
    %c0_i32_2 = arith.constant 0 : i32
    return %c0_i32, %c0_i32_0, %c0_i32_1 : i32, i32, i32
  }
  func.func @transform_2(%arg0: i32) -> (i32, i32) {
    %c0_i32 = arith.constant 0 : i32
    %c0_i32_0 = arith.constant 0 : i32
    %c0_i32_1 = arith.constant 0 : i32
    return %c0_i32, %c0_i32_0 : i32, i32
  }
  func.func @transform_3(%arg0: i32) -> (i32, i32) {
    %c0_i32 = arith.constant 0 : i32
    %c0_i32_0 = arith.constant 0 : i32
    %c0_i32_1 = arith.constant 0 : i32
    return %c0_i32, %c0_i32_0 : i32, i32
  }
  func.func @transform_4(%arg0: i32) -> (i32, i32, i32) {
    %c0_i32 = arith.constant 0 : i32
    %c0_i32_0 = arith.constant 0 : i32
    %c0_i32_1 = arith.constant 0 : i32
    return %c0_i32, %arg0, %c0_i32_0 : i32, i32, i32
  }
}

</mosaic_0001>

<llo_original>
// kernel: tpu_custom_call.1
$region0: #{tpu_custom_call.1}
  #allocation0 [shape = 'u32[]', space=smem, size = 0x4, offset = 0x4, fixed_abs, tag = 'smem constant byte address 0x4 - core index']
  #allocation1 [shape = 'u32[72,128]{1,0:T(1,128)}', space=vmem, size = 0x9000, scoped, tag = 'internal scratch']
  %s0 = inlined_call_operand.vmem [shape: bf16[16,16], index: 0, kind: input, shape index: {}]
  %s1 = inlined_call_operand.vmem [shape: bf16[2,16,4], index: 1, kind: input, shape index: {}]
  %s2 = inlined_call_operand.vmem [shape: bf16[4,128], index: 2, kind: input, shape index: {}]
  %s3 = inlined_call_operand.vmem [shape: f32[2,128], index: 3, kind: input, shape index: {}]
  %s4 = inlined_call_operand.hbm [shape: f32[2,16,128], index: 4, kind: output, shape index: {}]
  %s5 = sld [smem:[#allocation0]]
  $region26: #{tpu_custom_call.1} parent=0
    _
  %s7 = ssub.s32 1, %s5
  %s8 = scalar_select 0, %s7, %s5
  $region1: #{tpu_custom_call.1} parent=0
    #allocation2 [shape = 'u8[16384]{0}', space=vmem, size = 0x4000, scoped, tag = 'output window, operand 0, single buffered']
    #allocation3 [shape = 's32[1]{0}', space=sflag, size = 0x4, scoped, tag = 'scoped memory for tpu_custom_call.1']
    %9 = vsyncpa [#allocation3], 0
    // Predicated region
    $region2: #{tpu_custom_call.1} parent=1 // pred_check
      _
    $region3: #{tpu_custom_call.1} parent=1 // pred_check_branch
      %11 = sbr.rel (0) target = $region5
    $region4: #{tpu_custom_call.1} parent=1 // pred_region
      _
    $region5: #{tpu_custom_call.1} parent=1 // pred_fallthru
      _
    // Predicated region
    $region6: #{tpu_custom_call.1} parent=1 // pred_check
      _
    $region7: #{tpu_custom_call.1} parent=1 // pred_check_branch
      %13 = sbr.rel (0) target = $region9
    $region8: #{tpu_custom_call.1} parent=1 // pred_region
      _
    $region9: #{tpu_custom_call.1} parent=1 // pred_fallthru
      _
    // Predicated region
    $region10: #{tpu_custom_call.1} parent=1 // pred_check
      _
    $region11: #{tpu_custom_call.1} parent=1 // pred_check_branch
      %15 = sbr.rel (0) target = $region13
    $region12: #{tpu_custom_call.1} parent=1 // pred_region
      _
    $region13: #{tpu_custom_call.1} parent=1 // pred_fallthru
      _
    // Predicated region
    $region14: #{tpu_custom_call.1} parent=1 // pred_check
      _
    $region15: #{tpu_custom_call.1} parent=1 // pred_check_branch
      %17 = sbr.rel (0) target = $region17
    $region16: #{tpu_custom_call.1} parent=1 // pred_region
      _
    $region17: #{tpu_custom_call.1} parent=1 // pred_fallthru
      _
    %v19 = vld [vmem:[%s0] sm:$0xf]
    %v20 = vld [vmem:[%s0 + $0x4] sm:$0xf]
    %v21 = vld [vmem:[%s2] sm:$0x3]
    %v22 = vld [vmem:[%s3] sm:$0x3]
    %v23 = vld [vmem:[%s1] sm:$0xf]
    %v24 = vld [vmem:[%s1 + $0x4] sm:$0xf]
    %v27 = vunpack.c.l.b16 %v19
    %v28 = vunpack.c.l.b16 %v20
    %v29 = vpack.c.b16 %v28, %v27
    %v32 = vunpack.c.l.b16 %v23
    %v33 = vunpack.c.l.b16 %v24
    %v34 = vpack.c.b16 %v33, %v32
    %vm36 = vcmask 130048
    %v38 = vsel %vm36, %v29, 0
    %40 = vmatpush.bf16.msra.mxu0 0
    %41 = vmatpush.bf16.msra.mxu0 0
    %42 = vmatpush.bf16.msra.mxu0 0
    %43 = vmatpush.bf16.msra.mxu0 0
    %44 = vmatpush.bf16.msra.mxu0 0
    %45 = vmatpush.bf16.msra.mxu0 0
    %46 = vmatpush.bf16.msra.mxu0 0
    %47 = vmatpush.bf16.msra.mxu0 %v34
    %48 = vmatmul.bf16.gmra.mxu0 %v38
    %v49 = vpop.f32.mrf.mxu0
    %v50 = vadd.f32 0.0, %v49
    %v51 = vpop.f32.mrf.mxu0
    %v52 = vadd.f32 0.0, %v51
    %53 = vdwg.mxu0
    %v54 = vpack.c.bf16 %v52, %v50
    %v55 = vperm.slane %v22, 0
    %vm56 = vcmask 31744
    %v58 = vsel %vm56, %v54, 0
    %vm60 = vcmask 1041408
    %v62 = vsel %vm60, %v21, 0
    %64 = vmatpush.bf16.msra.mxu0 0
    %65 = vmatpush.bf16.msra.mxu0 0
    %66 = vmatpush.bf16.msra.mxu0 0
    %67 = vmatpush.bf16.msra.mxu0 0
    %68 = vmatpush.bf16.msra.mxu0 0
    %69 = vmatpush.bf16.msra.mxu0 0
    %70 = vmatpush.bf16.msra.mxu0 0
    %71 = vmatpush.bf16.msra.mxu0 %v62
    %72 = vmatmul.bf16.gmra.mxu0 %v58
    %v73 = vpop.f32.mrf.mxu0
    %v74 = vadd.f32 %v55, %v73
    %v75 = vpop.f32.mrf.mxu0
    %v76 = vadd.f32 %v55, %v75
    %77 = vdwg.mxu0
    %78 = vst [vmem:[#allocation2] sm:$0xff] %v74
    %79 = vst [vmem:[#allocation2 + $0x8] sm:$0xff] %v76
    %s80 = scalar_lea.vmem %s1, 8
    %v81 = vld [vmem:[%s80] sm:$0xf]
    %v82 = vld [vmem:[%s80 + $0x4] sm:$0xf]
    %v85 = vunpack.c.l.b16 %v81
    %v86 = vunpack.c.l.b16 %v82
    %v87 = vpack.c.b16 %v86, %v85
    %89 = vmatpush.bf16.msra.mxu0 0
    %90 = vmatpush.bf16.msra.mxu0 0
    %91 = vmatpush.bf16.msra.mxu0 0
    %92 = vmatpush.bf16.msra.mxu0 0
    %93 = vmatpush.bf16.msra.mxu0 0
    %94 = vmatpush.bf16.msra.mxu0 0
    %95 = vmatpush.bf16.msra.mxu0 0
    %96 = vmatpush.bf16.msra.mxu0 %v87
    %97 = vmatmul.bf16.gmra.mxu0 %v38
    %v98 = vpop.f32.mrf.mxu0
    %v99 = vadd.f32 0.0, %v98
    %v100 = vpop.f32.mrf.mxu0
    %v101 = vadd.f32 0.0, %v100
    %102 = vdwg.mxu0
    %v103 = vpack.c.bf16 %v101, %v99
    %v104 = vperm.slane %v22, 1
    %v106 = vsel %vm56, %v103, 0
    %108 = vmatpush.bf16.msra.mxu0 0
    %109 = vmatpush.bf16.msra.mxu0 0
    %110 = vmatpush.bf16.msra.mxu0 0
    %111 = vmatpush.bf16.msra.mxu0 0
    %112 = vmatpush.bf16.msra.mxu0 0
    %113 = vmatpush.bf16.msra.mxu0 0
    %114 = vmatpush.bf16.msra.mxu0 0
    %115 = vmatpush.bf16.msra.mxu0 %v62
    %116 = vmatmul.bf16.gmra.mxu0 %v106
    %v117 = vpop.f32.mrf.mxu0
    %v118 = vadd.f32 %v104, %v117
    %v119 = vpop.f32.mrf.mxu0
    %v120 = vadd.f32 %v104, %v119
    %121 = vdwg.mxu0
    %s122 = scalar_lea.vmem [#allocation2], 16
    %123 = vst [vmem:[%s122] sm:$0xff] %v118
    %124 = vst [vmem:[%s122 + $0x8] sm:$0xff] %v120
    // Predicated region
    $region18: #{tpu_custom_call.1} parent=1 // pred_check
      _
    $region19: #{tpu_custom_call.1} parent=1 // pred_check_branch
      %126 = sbr.rel (0) target = $region21
    $region20: #{tpu_custom_call.1} parent=1 // pred_region
      %128 = vsyncadd [#allocation3], 0
      %s129 = sshll.u32 [#allocation2], 4
      %s130 = int_to_ptr.vmem [resolvable:$true] %s129
      %s131 = sshll.u32 %s4, 4
      %s132 = int_to_ptr.hbm [resolvable:$true] %s131
      %137 = dma.vmem_to_hbm [thread:$0]  %s130, 512, %s132, [#allocation3], 128, 128, 8
    $region21: #{tpu_custom_call.1} parent=1 // pred_fallthru
      _
    // Predicated region
    $region22: #{tpu_custom_call.1} parent=1 // pred_check
      _
    $region23: #{tpu_custom_call.1} parent=1 // pred_check_branch
      %139 = sbr.rel (0) target = $region25
    $region24: #{tpu_custom_call.1} parent=1 // pred_region
      %141 = dma.done [#allocation3], 512
    $region25: #{tpu_custom_call.1} parent=1 // pred_fallthru
      _
    %142 = vsyncpa [#allocation3], 1

</llo_original>
